<compile_context>
chip_gen: v7x
topology: tpu7x:2x2x1
jax: 0.10.0
libtpu: 0.0.40
codegen_flags: <defaults>
</compile_context>

<pallas_src>
import functools

import jax
import jax.numpy as jnp
from jax.experimental import pallas as pl
from jax.experimental.pallas import tpu as pltpu

LANE = 128


def _round_up(x, m):
    return ((x + m - 1) // m) * m


def ssn_head_kernel(
    act_feat_ref,   # (TM, C_act)     bf16  row tile of activity features
    comp_feat_ref,  # (TM, C_comp)    bf16  row tile of completeness features
    w_act_ref,      # (C_act, P)      bf16  W_act.T in cols [0, K_act), zeros elsewhere
    w_cr_ref,       # (C_comp, P)     bf16  [W_comp.T | W_reg.T] in cols [K_act, total)
    b_ref,          # (1, P)          f32   fused bias
    out_ref,        # (TM, P)         f32   single lane-dense fused output slab
):
    out_ref[...] = (
        jnp.dot(act_feat_ref[...], w_act_ref[...],
                preferred_element_type=jnp.float32)
        + jnp.dot(comp_feat_ref[...], w_cr_ref[...],
                  preferred_element_type=jnp.float32)
        + b_ref[...]
    )


def prepare_ssn_head_params(params, compute_dtype=jnp.bfloat16):
    """One-time weight prep OUTSIDE the jitted hot path.

    PyTorch (out, in) weights are transposed to (in, out), placed into two
    P-wide zero-padded column slabs (activity in cols [0, K_act),
    completeness|regressor in cols [K_act, K_act+3K)), cast to bf16, and the
    biases are fused into one f32 row. Zero columns in each weight slab make
    the in-kernel sum of the two matmuls exact.
    """
    k_act = params["w_act"].shape[0]     # num_classes + 1
    k_comp = params["w_comp"].shape[0]   # num_classes
    k_reg = params["w_reg"].shape[0]     # 2 * num_classes
    c_act = params["w_act"].shape[1]
    c_comp = params["w_comp"].shape[1]
    total = k_act + k_comp + k_reg
    p_out = _round_up(total, LANE)

    w_act_p = (jnp.zeros((c_act, p_out), compute_dtype)
               .at[:, :k_act].set(params["w_act"].T.astype(compute_dtype)))
    w_cr = jnp.concatenate([params["w_comp"].T, params["w_reg"].T], axis=1)
    w_cr_p = (jnp.zeros((c_comp, p_out), compute_dtype)
              .at[:, k_act:total].set(w_cr.astype(compute_dtype)))
    b_fused = jnp.concatenate(
        [params["b_act"], params["b_comp"], params["b_reg"]]).astype(jnp.float32)
    b_p = jnp.zeros((1, p_out), jnp.float32).at[0, :total].set(b_fused)

    return {
        "w_act_p": w_act_p,
        "w_cr_p": w_cr_p,
        "b_p": b_p,
        "k_act": k_act,
        "k_comp": k_comp,
        "k_reg": k_reg,
        # Static column offsets into the fused slab (zero-copy consumer path).
        "col_offsets": {
            "act": (0, k_act),
            "comp": (k_act, k_act + k_comp),
            "reg": (k_act + k_comp, total),
        },
    }


@functools.partial(jax.jit, static_argnames=("tile_rows",))
def _ssn_head_fused_slab(activity_feat, completeness_feat,
                         w_act_p, w_cr_p, b_p, *, tile_rows=1024):
    n, c_act = activity_feat.shape
    _, c_comp = completeness_feat.shape
    p_out = w_act_p.shape[1]
    compute_dtype = w_act_p.dtype

    # bf16 streaming inputs (no-op if the caller already supplies bf16).
    act_s = activity_feat.astype(compute_dtype)
    comp_s = completeness_feat.astype(compute_dtype)

    # Row tile: multiple of 16 (bf16 sublane packing), >= 16, auto-shrunk to a
    # v7x-safe scoped-VMEM budget. No feature padding: the boundary block may
    # overhang; Pallas masks the partial tile and the output is exactly (n, P).
    n16 = _round_up(max(n, 1), 16)
    tm = max(16, (min(tile_rows, n16) // 16) * 16)

    def vmem_bytes(t):
        feat = 2 * t * (c_act + c_comp) * 2            # bf16 inputs, double-buffered
        out = 2 * t * p_out * 4                        # f32 output, double-buffered
        wts = 2 * ((c_act + c_comp) * p_out * 2 + p_out * 4)  # resident weights/bias
        return feat + out + wts

    vmem_budget = 44 * 1024 * 1024                     # fits v7x 64 MiB with headroom
    while vmem_bytes(tm) > vmem_budget and tm > 16:
        tm = max(16, (tm // 2 // 16) * 16)
    vmem_limit = int(min(max(vmem_bytes(tm) * 5 // 4, 24 * 1024 * 1024),
                         48 * 1024 * 1024))

    grid = (pl.cdiv(n, tm),)

    flops = 2 * n * (c_act + c_comp) * p_out
    bytes_accessed = (
        n * (c_act + c_comp) * 2                       # bf16 feature reads
        + (c_act + c_comp) * p_out * 2                 # bf16 weight reads
        + p_out * 4                                    # bias
        + n * p_out * 4                                # f32 output writes
    )

    out = pl.pallas_call(
        ssn_head_kernel,
        out_shape=jax.ShapeDtypeStruct((n, p_out), jnp.float32),
        grid_spec=pltpu.PrefetchScalarGridSpec(
            num_scalar_prefetch=0,
            grid=grid,
            in_specs=[
                pl.BlockSpec((tm, c_act), lambda i: (i, 0)),     # activity rows
                pl.BlockSpec((tm, c_comp), lambda i: (i, 0)),    # completeness rows
                pl.BlockSpec((c_act, p_out), lambda i: (0, 0)),  # resident weights
                pl.BlockSpec((c_comp, p_out), lambda i: (0, 0)),
                pl.BlockSpec((1, p_out), lambda i: (0, 0)),      # fused bias
            ],
            out_specs=pl.BlockSpec((tm, p_out), lambda i: (i, 0)),
        ),
        compiler_params=pltpu.CompilerParams(
            dimension_semantics=("parallel",),
            vmem_limit_bytes=vmem_limit,
        ),
        cost_estimate=pl.CostEstimate(
            flops=flops, transcendentals=0, bytes_accessed=bytes_accessed),
    )(act_s, comp_s, w_act_p, w_cr_p, b_p)
    return out


def ssn_head_forward_fused(activity_feat, completeness_feat, prepped,
                           tile_rows=1024):
    """Recommended path: returns the (N, P) fused slab plus static column
    offsets — no post-kernel slice copies; consumers index the slab directly."""
    slab = _ssn_head_fused_slab(
        activity_feat, completeness_feat,
        prepped["w_act_p"], prepped["w_cr_p"], prepped["b_p"],
        tile_rows=tile_rows)
    return slab, prepped["col_offsets"]


def ssn_head_forward(activity_feat, completeness_feat, prepped, tile_rows=1024):
    """PyTorch-compatible 3-tuple (act_score, comp_score, bbox_pred).
    Note: the column slices materialize copies; prefer ssn_head_forward_fused
    when the consumer can take the padded slab."""
    slab, off = ssn_head_forward_fused(
        activity_feat, completeness_feat, prepped, tile_rows=tile_rows)
    a0, a1 = off["act"]
    c0, c1 = off["comp"]
    r0, r1 = off["reg"]
    return slab[:, a0:a1], slab[:, c0:c1], slab[:, r0:r1]


def init_ssn_head_params(key, in_channels_activity, in_channels_complete,
                         in_channels_tasks, num_classes, init_std=0.001):
    """Mirrors SSNHead.__init__ + init_weights (normal(0, init_std) weights,
    zero biases). with_bg=False so num_classes is unchanged."""
    k1, k2, k3 = jax.random.split(key, 3)
    c_act = in_channels_activity + in_channels_tasks
    c_comp = in_channels_complete + in_channels_tasks
    return {
        "w_act": init_std * jax.random.normal(k1, (num_classes + 1, c_act), jnp.float32),
        "b_act": jnp.zeros((num_classes + 1,), jnp.float32),
        "w_comp": init_std * jax.random.normal(k2, (num_classes, c_comp), jnp.float32),
        "b_comp": jnp.zeros((num_classes,), jnp.float32),
        "w_reg": init_std * jax.random.normal(k3, (num_classes * 2, c_comp), jnp.float32),
        "b_reg": jnp.zeros((num_classes * 2,), jnp.float32),
    }


if __name__ == "__main__":
    # Small, module-consistent shapes. batch=10 deliberately not a multiple of
    # the tile to exercise the partial boundary block (no host-side padding).
    batch = 10
    in_channels_activity = 256
    in_channels_complete = 256
    in_channels_tasks = 0          # task_feat is None
    num_classes = 20

    key = jax.random.PRNGKey(0)
    kp, ka, kc = jax.random.split(key, 3)

    params = init_ssn_head_params(
        kp, in_channels_activity, in_channels_complete,
        in_channels_tasks, num_classes, init_std=0.001)
    prepped = prepare_ssn_head_params(params)   # one-time, outside hot path

    activity_feat = jax.random.normal(ka, (batch, in_channels_activity), jnp.float32)
    completeness_feat = jax.random.normal(kc, (batch, in_channels_complete), jnp.float32)

    # Zero-copy recommended path.
    slab, col_offsets = ssn_head_forward_fused(activity_feat, completeness_feat, prepped)
    # PyTorch-compatible 3-tuple path (reuses the same compiled kernel).
    act_score, comp_score, bbox_pred = ssn_head_forward(
        activity_feat, completeness_feat, prepped)
    jax.block_until_ready((slab, act_score, comp_score, bbox_pred))

    # Pure-JAX f32 reference (PyTorch Linear: y = x @ W.T + b). bf16 input
    # streaming with f32 accumulation -> compare with modest tolerances.
    ref_act = activity_feat @ params["w_act"].T + params["b_act"]
    ref_comp = completeness_feat @ params["w_comp"].T + params["b_comp"]
    ref_reg = completeness_feat @ params["w_reg"].T + params["b_reg"]

    assert slab.shape == (batch, 128)
    assert act_score.shape == (batch, num_classes + 1)
    assert comp_score.shape == (batch, num_classes)
    assert bbox_pred.shape == (batch, num_classes * 2)
    assert jnp.allclose(act_score, ref_act, atol=2e-3, rtol=1e-2)
    assert jnp.allclose(comp_score, ref_comp, atol=2e-3, rtol=1e-2)
    assert jnp.allclose(bbox_pred, ref_reg, atol=2e-3, rtol=1e-2)
    # Fused-slab columns agree with the sliced outputs.
    a0, a1 = col_offsets["act"]
    assert jnp.array_equal(slab[:, a0:a1], act_score)

    print("KERNEL_OK")
</pallas_src>

<mosaic_0001>
module attributes {stable_mosaic.version = 11 : i64} {
  func.func @ssn_head_kernel(%arg0: i32, %arg1: memref<16x256xbf16, #tpu.memory_space<vmem>>, %arg2: memref<16x256xbf16, #tpu.memory_space<vmem>>, %arg3: memref<256x128xbf16, #tpu.memory_space<vmem>>, %arg4: memref<256x128xbf16, #tpu.memory_space<vmem>>, %arg5: memref<1x128xf32, #tpu.memory_space<vmem>>, %arg6: memref<16x128xf32, #tpu.memory_space<vmem>>) attributes {dimension_semantics = [#tpu.dimension_semantics<parallel>], iteration_bounds = array<i64: 1>, scalar_prefetch = 0 : i64, scratch_operands = 0 : i64, tpu.core_type = #tpu.core_type<tc>, window_params = [{transform_indices = @transform_0, window_bounds = array<i64: 16, 256>}, {transform_indices = @transform_1, window_bounds = array<i64: 16, 256>}, {pipeline_mode = #tpu.pipeline_mode<synchronous>, transform_indices = @transform_2, window_bounds = array<i64: 256, 128>}, {pipeline_mode = #tpu.pipeline_mode<synchronous>, transform_indices = @transform_3, window_bounds = array<i64: 256, 128>}, {pipeline_mode = #tpu.pipeline_mode<synchronous>, transform_indices = @transform_4, window_bounds = array<i64: 1, 128>}, {transform_indices = @transform_5, window_bounds = array<i64: 16, 128>}]} {
    %c0 = arith.constant 0 : index
    %c0_0 = arith.constant 0 : index
    %0 = vector.load %arg1[%c0, %c0_0] : memref<16x256xbf16, #tpu.memory_space<vmem>>, vector<16x256xbf16>
    %c0_1 = arith.constant 0 : index
    %c0_2 = arith.constant 0 : index
    %1 = vector.load %arg3[%c0_1, %c0_2] : memref<256x128xbf16, #tpu.memory_space<vmem>>, vector<256x128xbf16>
    %cst = arith.constant dense<0.000000e+00> : vector<16x128xf32>
    %2 = tpu.matmul %0, %1, %cst {dimension_numbers = #tpu.dot_dimension_numbers<[1], [0], [0], [1], [0, 0, 1, 1], [], []>} : vector<16x256xbf16>, vector<256x128xbf16>, vector<16x128xf32> -> vector<16x128xf32>
    %c0_3 = arith.constant 0 : index
    %c0_4 = arith.constant 0 : index
    %3 = vector.load %arg2[%c0_3, %c0_4] : memref<16x256xbf16, #tpu.memory_space<vmem>>, vector<16x256xbf16>
    %c0_5 = arith.constant 0 : index
    %c0_6 = arith.constant 0 : index
    %4 = vector.load %arg4[%c0_5, %c0_6] : memref<256x128xbf16, #tpu.memory_space<vmem>>, vector<256x128xbf16>
    %cst_7 = arith.constant dense<0.000000e+00> : vector<16x128xf32>
    %5 = tpu.matmul %3, %4, %cst_7 {dimension_numbers = #tpu.dot_dimension_numbers<[1], [0], [0], [1], [0, 0, 1, 1], [], []>} : vector<16x256xbf16>, vector<256x128xbf16>, vector<16x128xf32> -> vector<16x128xf32>
    %6 = arith.addf %2, %5 : vector<16x128xf32>
    %c0_8 = arith.constant 0 : index
    %c0_9 = arith.constant 0 : index
    %7 = vector.load %arg5[%c0_8, %c0_9] : memref<1x128xf32, #tpu.memory_space<vmem>>, vector<1x128xf32>
    %8 = vector.broadcast %7 : vector<1x128xf32> to vector<16x128xf32>
    %9 = arith.addf %6, %8 : vector<16x128xf32>
    %c0_10 = arith.constant 0 : index
    %c0_11 = arith.constant 0 : index
    %10 = vector.load %arg6[%c0_10, %c0_11] : memref<16x128xf32, #tpu.memory_space<vmem>>, vector<16x128xf32>
    tpu.vector_store %arg6[%c0_10, %c0_11], %9 {strides = array<i32>} : memref<16x128xf32, #tpu.memory_space<vmem>>, vector<16x128xf32>,
    return
  }
  func.func @transform_0(%arg0: i32) -> (i32, i32) {
    %c0_i32 = arith.constant 0 : i32
    %c0_i32_0 = arith.constant 0 : i32
    return %arg0, %c0_i32 : i32, i32
  }
  func.func @transform_1(%arg0: i32) -> (i32, i32) {
    %c0_i32 = arith.constant 0 : i32
    %c0_i32_0 = arith.constant 0 : i32
    return %arg0, %c0_i32 : i32, i32
  }
  func.func @transform_2(%arg0: i32) -> (i32, i32) {
    %c0_i32 = arith.constant 0 : i32
    %c0_i32_0 = arith.constant 0 : i32
    %c0_i32_1 = arith.constant 0 : i32
    return %c0_i32, %c0_i32_0 : i32, i32
  }
  func.func @transform_3(%arg0: i32) -> (i32, i32) {
    %c0_i32 = arith.constant 0 : i32
    %c0_i32_0 = arith.constant 0 : i32
    %c0_i32_1 = arith.constant 0 : i32
    return %c0_i32, %c0_i32_0 : i32, i32
  }
  func.func @transform_4(%arg0: i32) -> (i32, i32) {
    %c0_i32 = arith.constant 0 : i32
    %c0_i32_0 = arith.constant 0 : i32
    %c0_i32_1 = arith.constant 0 : i32
    return %c0_i32, %c0_i32_0 : i32, i32
  }
  func.func @transform_5(%arg0: i32) -> (i32, i32) {
    %c0_i32 = arith.constant 0 : i32
    %c0_i32_0 = arith.constant 0 : i32
    return %arg0, %c0_i32 : i32, i32
  }
}

</mosaic_0001>

<llo_original>
// kernel: _ssn_head_fused_slab.1
$region0: #{_ssn_head_fused_slab.1}
  #allocation0 [shape = 'u32[]', space=smem, size = 0x4, offset = 0x4, fixed_abs, tag = 'smem constant byte address 0x4 - core index']
  #allocation1 [shape = 'u32[144,128]{1,0:T(1,128)}', space=vmem, size = 0x12000, scoped, tag = 'internal scratch']
  %s0 = inlined_call_operand.vmem [shape: bf16[10,256], index: 0, kind: input, shape index: {}]
  %s1 = inlined_call_operand.vmem [shape: bf16[10,256], index: 1, kind: input, shape index: {}]
  %s2 = inlined_call_operand.hbm [shape: bf16[256,128], index: 2, kind: input, shape index: {}]
  %s3 = inlined_call_operand.hbm [shape: bf16[256,128], index: 3, kind: input, shape index: {}]
  %s4 = inlined_call_operand.vmem [shape: f32[1,128], index: 4, kind: input, shape index: {}]
  %s5 = inlined_call_operand.hbm [shape: f32[10,128], index: 5, kind: output, shape index: {}]
  %s6 = sld [smem:[#allocation0]]
  $region38: #{_ssn_head_fused_slab.1} parent=0
    _
  %s8 = ssub.s32 1, %s6
  %s9 = scalar_select 0, %s8, %s6
  $region1: #{_ssn_head_fused_slab.1} parent=0
    #allocation2 [shape = 'u8[65536]{0}', space=vmem, size = 0x10000, scoped, tag = 'input window, operand 2, single buffered']
    #allocation3 [shape = 's32[1]{0}', space=sflag, size = 0x4, scoped, tag = 'scoped memory for _ssn_head_fused_slab.1']
    #allocation4 [shape = 's32[1]{0}', space=sflag, size = 0x4, scoped, tag = 'scoped memory for _ssn_head_fused_slab.1']
    #allocation5 [shape = 'u8[65536]{0}', space=vmem, size = 0x10000, scoped, tag = 'input window, operand 3, single buffered']
    #allocation6 [shape = 's32[1]{0}', space=sflag, size = 0x4, scoped, tag = 'scoped memory for _ssn_head_fused_slab.1']
    #allocation7 [shape = 'u8[8192]{0}', space=vmem, size = 0x2000, scoped, tag = 'output window, operand 0, single buffered']
    %10 = vsyncpa [#allocation3], 0
    %11 = vsyncpa [#allocation6], 0
    %12 = vsyncpa [#allocation4], 0
    // Predicated region
    $region2: #{_ssn_head_fused_slab.1} parent=1 // pred_check
      _
    $region3: #{_ssn_head_fused_slab.1} parent=1 // pred_check_branch
      %14 = sbr.rel (0) target = $region5
    $region4: #{_ssn_head_fused_slab.1} parent=1 // pred_region
      _
    $region5: #{_ssn_head_fused_slab.1} parent=1 // pred_fallthru
      _
    // Predicated region
    $region6: #{_ssn_head_fused_slab.1} parent=1 // pred_check
      _
    $region7: #{_ssn_head_fused_slab.1} parent=1 // pred_check_branch
      %16 = sbr.rel (0) target = $region9
    $region8: #{_ssn_head_fused_slab.1} parent=1 // pred_region
      _
    $region9: #{_ssn_head_fused_slab.1} parent=1 // pred_fallthru
      _
    // Predicated region
    $region10: #{_ssn_head_fused_slab.1} parent=1 // pred_check
      _
    $region11: #{_ssn_head_fused_slab.1} parent=1 // pred_check_branch
      %18 = sbr.rel (0) target = $region13
    $region12: #{_ssn_head_fused_slab.1} parent=1 // pred_region
      %s20 = ssub.s32 2048, 2048
      %21 = vsyncadd [#allocation3], %s20
      %s22 = sshll.u32 [#allocation2], 4
      %s23 = int_to_ptr.vmem [resolvable:$true] %s22
      %28 = dma.hbm_to_vmem [thread:$0]  %s2, 2048, %s23, [#allocation3], 64, 64, 4
    $region13: #{_ssn_head_fused_slab.1} parent=1 // pred_fallthru
      _
    // Predicated region
    $region14: #{_ssn_head_fused_slab.1} parent=1 // pred_check
      _
    $region15: #{_ssn_head_fused_slab.1} parent=1 // pred_check_branch
      %30 = sbr.rel (0) target = $region17
    $region16: #{_ssn_head_fused_slab.1} parent=1 // pred_region
      %s32 = ssub.s32 2048, 2048
      %33 = vsyncadd [#allocation6], %s32
      %s34 = sshll.u32 [#allocation5], 4
      %s35 = int_to_ptr.vmem [resolvable:$true] %s34
      %40 = dma.hbm_to_vmem [thread:$0]  %s3, 2048, %s35, [#allocation6], 64, 64, 4
    $region17: #{_ssn_head_fused_slab.1} parent=1 // pred_fallthru
      _
    // Predicated region
    $region18: #{_ssn_head_fused_slab.1} parent=1 // pred_check
      _
    $region19: #{_ssn_head_fused_slab.1} parent=1 // pred_check_branch
      %42 = sbr.rel (0) target = $region21
    $region20: #{_ssn_head_fused_slab.1} parent=1 // pred_region
      _
    $region21: #{_ssn_head_fused_slab.1} parent=1 // pred_fallthru
      _
    // Predicated region
    $region22: #{_ssn_head_fused_slab.1} parent=1 // pred_check
      _
    $region23: #{_ssn_head_fused_slab.1} parent=1 // pred_check_branch
      %44 = sbr.rel (0) target = $region25
    $region24: #{_ssn_head_fused_slab.1} parent=1 // pred_region
      %45 = dma.done [#allocation3], 2048
    $region25: #{_ssn_head_fused_slab.1} parent=1 // pred_fallthru
      _
    // Predicated region
    $region26: #{_ssn_head_fused_slab.1} parent=1 // pred_check
      _
    $region27: #{_ssn_head_fused_slab.1} parent=1 // pred_check_branch
      %47 = sbr.rel (0) target = $region29
    $region28: #{_ssn_head_fused_slab.1} parent=1 // pred_region
      %48 = dma.done [#allocation6], 2048
    $region29: #{_ssn_head_fused_slab.1} parent=1 // pred_fallthru
      _
    %v50 = vld [vmem:[%s0] sm:$0xff]
    %v51 = vld [vmem:[%s0 + $0x8] sm:$0xff]
    %v52 = vld [vmem:[#allocation2] sm:$0xf]
    %v53 = vld [vmem:[#allocation2 + $0x4] sm:$0xf]
    %v54 = vld [vmem:[#allocation2 + $0x8] sm:$0xf]
    %v55 = vld [vmem:[#allocation2 + $0xc] sm:$0xf]
    %v56 = vld [vmem:[#allocation2 + $0x10] sm:$0xf]
    %v57 = vld [vmem:[#allocation2 + $0x14] sm:$0xf]
    %v58 = vld [vmem:[#allocation2 + $0x18] sm:$0xf]
    %v59 = vld [vmem:[#allocation2 + $0x1c] sm:$0xf]
    %v60 = vld [vmem:[#allocation2 + $0x20] sm:$0xf]
    %v61 = vld [vmem:[#allocation2 + $0x24] sm:$0xf]
    %v62 = vld [vmem:[#allocation2 + $0x28] sm:$0xf]
    %v63 = vld [vmem:[#allocation2 + $0x2c] sm:$0xf]
    %v64 = vld [vmem:[#allocation2 + $0x30] sm:$0xf]
    %v65 = vld [vmem:[#allocation2 + $0x34] sm:$0xf]
    %v66 = vld [vmem:[#allocation2 + $0x38] sm:$0xf]
    %v67 = vld [vmem:[#allocation2 + $0x3c] sm:$0xf]
    %v68 = vld [vmem:[#allocation2 + $0x40] sm:$0xf]
    %v69 = vld [vmem:[#allocation2 + $0x44] sm:$0xf]
    %v70 = vld [vmem:[#allocation2 + $0x48] sm:$0xf]
    %v71 = vld [vmem:[#allocation2 + $0x4c] sm:$0xf]
    %v72 = vld [vmem:[#allocation2 + $0x50] sm:$0xf]
    %v73 = vld [vmem:[#allocation2 + $0x54] sm:$0xf]
    %v74 = vld [vmem:[#allocation2 + $0x58] sm:$0xf]
    %v75 = vld [vmem:[#allocation2 + $0x5c] sm:$0xf]
    %v76 = vld [vmem:[#allocation2 + $0x60] sm:$0xf]
    %v77 = vld [vmem:[#allocation2 + $0x64] sm:$0xf]
    %v78 = vld [vmem:[#allocation2 + $0x68] sm:$0xf]
    %v79 = vld [vmem:[#allocation2 + $0x6c] sm:$0xf]
    %v80 = vld [vmem:[#allocation2 + $0x70] sm:$0xf]
    %v81 = vld [vmem:[#allocation2 + $0x74] sm:$0xf]
    %v82 = vld [vmem:[#allocation2 + $0x78] sm:$0xf]
    %v83 = vld [vmem:[#allocation2 + $0x7c] sm:$0xf]
    %v84 = vld [vmem:[%s1] sm:$0xff]
    %v85 = vld [vmem:[%s1 + $0x8] sm:$0xff]
    %v86 = vld [vmem:[#allocation5] sm:$0xf]
    %v87 = vld [vmem:[#allocation5 + $0x4] sm:$0xf]
    %v88 = vld [vmem:[#allocation5 + $0x8] sm:$0xf]
    %v89 = vld [vmem:[#allocation5 + $0xc] sm:$0xf]
    %v90 = vld [vmem:[#allocation5 + $0x10] sm:$0xf]
    %v91 = vld [vmem:[#allocation5 + $0x14] sm:$0xf]
    %v92 = vld [vmem:[#allocation5 + $0x18] sm:$0xf]
    %v93 = vld [vmem:[#allocation5 + $0x1c] sm:$0xf]
    %v94 = vld [vmem:[#allocation5 + $0x20] sm:$0xf]
    %v95 = vld [vmem:[#allocation5 + $0x24] sm:$0xf]
    %v96 = vld [vmem:[#allocation5 + $0x28] sm:$0xf]
    %v97 = vld [vmem:[#allocation5 + $0x2c] sm:$0xf]
    %v98 = vld [vmem:[#allocation5 + $0x30] sm:$0xf]
    %v99 = vld [vmem:[#allocation5 + $0x34] sm:$0xf]
    %v100 = vld [vmem:[#allocation5 + $0x38] sm:$0xf]
    %v101 = vld [vmem:[#allocation5 + $0x3c] sm:$0xf]
    %v102 = vld [vmem:[#allocation5 + $0x40] sm:$0xf]
    %v103 = vld [vmem:[#allocation5 + $0x44] sm:$0xf]
    %v104 = vld [vmem:[#allocation5 + $0x48] sm:$0xf]
    %v105 = vld [vmem:[#allocation5 + $0x4c] sm:$0xf]
    %v106 = vld [vmem:[#allocation5 + $0x50] sm:$0xf]
    %v107 = vld [vmem:[#allocation5 + $0x54] sm:$0xf]
    %v108 = vld [vmem:[#allocation5 + $0x58] sm:$0xf]
    %v109 = vld [vmem:[#allocation5 + $0x5c] sm:$0xf]
    %v110 = vld [vmem:[#allocation5 + $0x60] sm:$0xf]
    %v111 = vld [vmem:[#allocation5 + $0x64] sm:$0xf]
    %v112 = vld [vmem:[#allocation5 + $0x68] sm:$0xf]
    %v113 = vld [vmem:[#allocation5 + $0x6c] sm:$0xf]
    %v114 = vld [vmem:[#allocation5 + $0x70] sm:$0xf]
    %v115 = vld [vmem:[#allocation5 + $0x74] sm:$0xf]
    %v116 = vld [vmem:[#allocation5 + $0x78] sm:$0xf]
    %v117 = vld [vmem:[#allocation5 + $0x7c] sm:$0xf]
    %v120 = vunpack.c.l.b16 %v84
    %v121 = vunpack.c.h.b16 %v84
    %v122 = vunpack.c.l.b16 %v85
    %v123 = vunpack.c.h.b16 %v85
    %v124 = vpack.c.b16 %v122, %v120
    %v125 = vpack.c.b16 %v123, %v121
    %v160 = vunpack.c.l.b16 %v86
    %v161 = vunpack.c.l.b16 %v87
    %v162 = vunpack.c.l.b16 %v88
    %v163 = vunpack.c.l.b16 %v89
    %v164 = vunpack.c.l.b16 %v90
    %v165 = vunpack.c.l.b16 %v91
    %v166 = vunpack.c.l.b16 %v92
    %v167 = vunpack.c.l.b16 %v93
    %v168 = vunpack.c.l.b16 %v94
    %v169 = vunpack.c.l.b16 %v95
    %v170 = vunpack.c.l.b16 %v96
    %v171 = vunpack.c.l.b16 %v97
    %v172 = vunpack.c.l.b16 %v98
    %v173 = vunpack.c.l.b16 %v99
    %v174 = vunpack.c.l.b16 %v100
    %v175 = vunpack.c.l.b16 %v101
    %v176 = vunpack.c.l.b16 %v102
    %v177 = vunpack.c.l.b16 %v103
    %v178 = vunpack.c.l.b16 %v104
    %v179 = vunpack.c.l.b16 %v105
    %v180 = vunpack.c.l.b16 %v106
    %v181 = vunpack.c.l.b16 %v107
    %v182 = vunpack.c.l.b16 %v108
    %v183 = vunpack.c.l.b16 %v109
    %v184 = vunpack.c.l.b16 %v110
    %v185 = vunpack.c.l.b16 %v111
    %v186 = vunpack.c.l.b16 %v112
    %v187 = vunpack.c.l.b16 %v113
    %v188 = vunpack.c.l.b16 %v114
    %v189 = vunpack.c.l.b16 %v115
    %v190 = vunpack.c.l.b16 %v116
    %v191 = vunpack.c.l.b16 %v117
    %v192 = vpack.c.b16 %v161, %v160
    %v193 = vpack.c.b16 %v163, %v162
    %v194 = vpack.c.b16 %v165, %v164
    %v195 = vpack.c.b16 %v167, %v166
    %v196 = vpack.c.b16 %v169, %v168
    %v197 = vpack.c.b16 %v171, %v170
    %v198 = vpack.c.b16 %v173, %v172
    %v199 = vpack.c.b16 %v175, %v174
    %v200 = vpack.c.b16 %v177, %v176
    %v201 = vpack.c.b16 %v179, %v178
    %v202 = vpack.c.b16 %v181, %v180
    %v203 = vpack.c.b16 %v183, %v182
    %v204 = vpack.c.b16 %v185, %v184
    %v205 = vpack.c.b16 %v187, %v186
    %v206 = vpack.c.b16 %v189, %v188
    %v207 = vpack.c.b16 %v191, %v190
    %224 = vmatprep.subr.bf16.mxu0 0
    %225 = vmatpush1.bf16.msra.mxu0 %v192
    %226 = vmatprep.subr.bf16.mxu0 0
    %227 = vmatpush1.bf16.msra.mxu0 %v193
    %228 = vmatprep.subr.bf16.mxu0 0
    %229 = vmatpush1.bf16.msra.mxu0 %v194
    %230 = vmatprep.subr.bf16.mxu0 0
    %231 = vmatpush1.bf16.msra.mxu0 %v195
    %232 = vmatprep.subr.bf16.mxu0 0
    %233 = vmatpush1.bf16.msra.mxu0 %v196
    %234 = vmatprep.subr.bf16.mxu0 0
    %235 = vmatpush1.bf16.msra.mxu0 %v197
    %236 = vmatprep.subr.bf16.mxu0 0
    %237 = vmatpush1.bf16.msra.mxu0 %v198
    %238 = vmatprep.subr.bf16.mxu0 0
    %239 = vmatpush1.bf16.msra.mxu0 %v199
    %240 = vmatprep.subr.bf16.mxu0 0
    %241 = vmatpush1.bf16.msra.mxu0 %v200
    %242 = vmatprep.subr.bf16.mxu0 0
    %243 = vmatpush1.bf16.msra.mxu0 %v201
    %244 = vmatprep.subr.bf16.mxu0 0
    %245 = vmatpush1.bf16.msra.mxu0 %v202
    %246 = vmatprep.subr.bf16.mxu0 0
    %247 = vmatpush1.bf16.msra.mxu0 %v203
    %248 = vmatprep.subr.bf16.mxu0 0
    %249 = vmatpush1.bf16.msra.mxu0 %v204
    %250 = vmatprep.subr.bf16.mxu0 0
    %251 = vmatpush1.bf16.msra.mxu0 %v205
    %252 = vmatprep.subr.bf16.mxu0 0
    %253 = vmatpush1.bf16.msra.mxu0 %v206
    %254 = vmatprep.subr.bf16.mxu0 0
    %255 = vmatpush1.bf16.msra.mxu0 %v207
    %256 = vmatprep.mubr.bf16.mxu0 %v125
    %257 = vmatmul.mubr.bf16.gmra.mrb[0].mxu0 %v124
    %v258 = vpop.f32.mrb[0].mxu0
    %v259 = vadd.f32 0.0, %v258
    %v260 = vpop.f32.mrb[0].mxu0
    %v261 = vpop.f32.mrb[0].mxu0
    %v262 = vadd.f32 0.0, %v261
    %v263 = vpop.f32.mrb[0].mxu0
    %264 = vdwg.mxu0
    %v267 = vunpack.c.l.b16 %v50
    %v268 = vunpack.c.h.b16 %v50
    %v269 = vunpack.c.l.b16 %v51
    %v270 = vunpack.c.h.b16 %v51
    %v271 = vpack.c.b16 %v269, %v267
    %v272 = vpack.c.b16 %v270, %v268
    %v307 = vunpack.c.l.b16 %v52
    %v308 = vunpack.c.l.b16 %v53
    %v309 = vunpack.c.l.b16 %v54
    %v310 = vunpack.c.l.b16 %v55
    %v311 = vunpack.c.l.b16 %v56
    %v312 = vunpack.c.l.b16 %v57
    %v313 = vunpack.c.l.b16 %v58
    %v314 = vunpack.c.l.b16 %v59
    %v315 = vunpack.c.l.b16 %v60
    %v316 = vunpack.c.l.b16 %v61
    %v317 = vunpack.c.l.b16 %v62
    %v318 = vunpack.c.l.b16 %v63
    %v319 = vunpack.c.l.b16 %v64
    %v320 = vunpack.c.l.b16 %v65
    %v321 = vunpack.c.l.b16 %v66
    %v322 = vunpack.c.l.b16 %v67
    %v323 = vunpack.c.l.b16 %v68
    %v324 = vunpack.c.l.b16 %v69
    %v325 = vunpack.c.l.b16 %v70
    %v326 = vunpack.c.l.b16 %v71
    %v327 = vunpack.c.l.b16 %v72
    %v328 = vunpack.c.l.b16 %v73
    %v329 = vunpack.c.l.b16 %v74
    %v330 = vunpack.c.l.b16 %v75
    %v331 = vunpack.c.l.b16 %v76
    %v332 = vunpack.c.l.b16 %v77
    %v333 = vunpack.c.l.b16 %v78
    %v334 = vunpack.c.l.b16 %v79
    %v335 = vunpack.c.l.b16 %v80
    %v336 = vunpack.c.l.b16 %v81
    %v337 = vunpack.c.l.b16 %v82
    %v338 = vunpack.c.l.b16 %v83
    %v339 = vpack.c.b16 %v308, %v307
    %v340 = vpack.c.b16 %v310, %v309
    %v341 = vpack.c.b16 %v312, %v311
    %v342 = vpack.c.b16 %v314, %v313
    %v343 = vpack.c.b16 %v316, %v315
    %v344 = vpack.c.b16 %v318, %v317
    %v345 = vpack.c.b16 %v320, %v319
    %v346 = vpack.c.b16 %v322, %v321
    %v347 = vpack.c.b16 %v324, %v323
    %v348 = vpack.c.b16 %v326, %v325
    %v349 = vpack.c.b16 %v328, %v327
    %v350 = vpack.c.b16 %v330, %v329
    %v351 = vpack.c.b16 %v332, %v331
    %v352 = vpack.c.b16 %v334, %v333
    %v353 = vpack.c.b16 %v336, %v335
    %v354 = vpack.c.b16 %v338, %v337
    %371 = vmatprep.subr.bf16.mxu0 0
    %372 = vmatpush1.bf16.msra.mxu0 %v339
    %373 = vmatprep.subr.bf16.mxu0 0
    %374 = vmatpush1.bf16.msra.mxu0 %v340
    %375 = vmatprep.subr.bf16.mxu0 0
    %376 = vmatpush1.bf16.msra.mxu0 %v341
    %377 = vmatprep.subr.bf16.mxu0 0
    %378 = vmatpush1.bf16.msra.mxu0 %v342
    %379 = vmatprep.subr.bf16.mxu0 0
    %380 = vmatpush1.bf16.msra.mxu0 %v343
    %381 = vmatprep.subr.bf16.mxu0 0
    %382 = vmatpush1.bf16.msra.mxu0 %v344
    %383 = vmatprep.subr.bf16.mxu0 0
    %384 = vmatpush1.bf16.msra.mxu0 %v345
    %385 = vmatprep.subr.bf16.mxu0 0
    %386 = vmatpush1.bf16.msra.mxu0 %v346
    %387 = vmatprep.subr.bf16.mxu0 0
    %388 = vmatpush1.bf16.msra.mxu0 %v347
    %389 = vmatprep.subr.bf16.mxu0 0
    %390 = vmatpush1.bf16.msra.mxu0 %v348
    %391 = vmatprep.subr.bf16.mxu0 0
    %392 = vmatpush1.bf16.msra.mxu0 %v349
    %393 = vmatprep.subr.bf16.mxu0 0
    %394 = vmatpush1.bf16.msra.mxu0 %v350
    %395 = vmatprep.subr.bf16.mxu0 0
    %396 = vmatpush1.bf16.msra.mxu0 %v351
    %397 = vmatprep.subr.bf16.mxu0 0
    %398 = vmatpush1.bf16.msra.mxu0 %v352
    %399 = vmatprep.subr.bf16.mxu0 0
    %400 = vmatpush1.bf16.msra.mxu0 %v353
    %401 = vmatprep.subr.bf16.mxu0 0
    %402 = vmatpush1.bf16.msra.mxu0 %v354
    %403 = vmatprep.mubr.bf16.mxu0 %v272
    %404 = vmatmul.mubr.bf16.gmra.mrb[0].mxu0 %v271
    %v405 = vpop.f32.mrb[0].mxu0
    %v406 = vadd.f32 %v259, %v405
    %v407 = vpop.f32.mrb[0].mxu0
    %v408 = vpop.f32.mrb[0].mxu0
    %v409 = vadd.f32 %v262, %v408
    %v410 = vpop.f32.mrb[0].mxu0
    %411 = vdwg.mxu0
    %v412 = vld [vmem:[%s4] sm:$0x1]
    %v414 = vlaneseq
    %v415 = vshrl.u32 %v414, 7
    %v416 = vsub.s32 0, %v415
    %v417 = vrot.slane %v412, %v416
    %v419 = vadd.f32 %v406, %v417
    %v420 = vadd.f32 %v409, %v417
    %421 = vst [vmem:[#allocation7] sm:$0xff] %v419
    %422 = vst [vmem:[#allocation7 + $0x8] sm:$0xff] %v420
    // Predicated region
    $region30: #{_ssn_head_fused_slab.1} parent=1 // pred_check
      _
    $region31: #{_ssn_head_fused_slab.1} parent=1 // pred_check_branch
      %424 = sbr.rel (0) target = $region33
    $region32: #{_ssn_head_fused_slab.1} parent=1 // pred_region
      %s426 = ssub.s32 256, 256
      %427 = vsyncadd [#allocation4], %s426
      %s428 = sshll.u32 [#allocation7], 4
      %s429 = int_to_ptr.vmem [resolvable:$true] %s428
      %434 = dma.vmem_to_hbm [thread:$0]  %s429, 256, %s5, [#allocation4], 128, 128, 8
    $region33: #{_ssn_head_fused_slab.1} parent=1 // pred_fallthru
      _
    // Predicated region
    $region34: #{_ssn_head_fused_slab.1} parent=1 // pred_check
      _
    $region35: #{_ssn_head_fused_slab.1} parent=1 // pred_check_branch
      %436 = sbr.rel (0) target = $region37
    $region36: #{_ssn_head_fused_slab.1} parent=1 // pred_region
      %437 = dma.done [#allocation4], 256
    $region37: #{_ssn_head_fused_slab.1} parent=1 // pred_fallthru
      _
    %438 = vsyncpa [#allocation3], 1
    %439 = vsyncpa [#allocation6], 1
    %440 = vsyncpa [#allocation4], 1

</llo_original>
